<compile_context>
chip_gen: v5e
topology: v5e:2x2
jax: 0.10.0
libtpu: 0.0.40
codegen_flags: <defaults>
</compile_context>

<pallas_src>
import functools
import math
from typing import NamedTuple

import jax
import jax.numpy as jnp
from jax.experimental import pallas as pl
from jax.experimental.pallas import tpu as pltpu


def _reference(pred, target, alpha=20.0):
    pred = pred.astype(jnp.float32)
    target = target.astype(jnp.float32)
    pos = jnp.mean((pred[:, :3] - target[:, :3]) ** 2)
    rot = jnp.mean((pred[:, 3:] - target[:, 3:]) ** 2)
    return pos + rot * alpha


class _TpuConfig(NamedTuple):
    n_splits: int
    is_v7: bool
    block_bytes: int
    vmem_limit_bytes: int


def _tpu_config():
    kind = ""
    try:
        kind = jax.devices()[0].device_kind.lower().replace(" ", "")
    except Exception:
        pass
    is_v7 = ("v7" in kind) or ("tpu7" in kind)
    big_vmem = any(tag in kind for tag in ("v4", "v5", "v6"))   # 128 MiB VMEM parts
    multi_tc = is_v7 or ("v4" in kind) or ("v5p" in kind)       # 2 TensorCores/chip
    if is_v7:
        block_bytes, vmem_limit = 4 << 20, 48 << 20             # 64 MiB physical VMEM
    elif big_vmem:
        block_bytes, vmem_limit = 8 << 20, 96 << 20             # 128 MiB physical VMEM
    else:
        block_bytes, vmem_limit = 4 << 20, 48 << 20             # conservative default
    return _TpuConfig(2 if multi_tc else 1, is_v7, block_bytes, vmem_limit)


def _all_nodes_loss_kernel(pred_ref, target_ref, out_ref, *,
                           tiles_per_split, tile_rows, valid_rows):
    # out_ref: (1, L) per-lane partial sums of diff**2, resident across the
    # "arbitrary" reduction axis; one disjoint block per split.
    s = pl.program_id(0)
    t = pl.program_id(1)
    tile = s * tiles_per_split + t          # true (unclamped) global tile index
    row0 = tile * tile_rows                 # first global row of this tile

    @pl.when(t == 0)
    def _():
        out_ref[...] = jnp.zeros_like(out_ref)

    diff = pred_ref[...].astype(jnp.float32) - target_ref[...].astype(jnp.float32)
    sq = diff * diff

    @pl.when(row0 + tile_rows <= valid_rows)
    def _():  # fully in-bounds tile: plain accumulate (steady state)
        out_ref[...] += jnp.sum(sq, axis=0, keepdims=True)

    @pl.when(row0 + tile_rows > valid_rows)
    def _():  # ragged last tile / clamped dead step: mask out-of-range rows
        rid = row0 + jax.lax.broadcasted_iota(jnp.int32, sq.shape, 0)
        out_ref[...] += jnp.sum(jnp.where(rid < valid_rows, sq, 0.0),
                                axis=0, keepdims=True)


def all_nodes_loss(pred, target, alpha=20.0, *, tile_rows=None, n_splits=None,
                   min_pallas_elements=262144):
    assert pred.shape == target.shape, (
        f"pred and target should have the same shape, got {pred.shape} and {target.shape}.")
    N, D = pred.shape
    assert D > 3, "need at least 3 position dims plus >=1 rotation dim"
    total = N * D

    # Small/medium inputs: pallas_call fixed overhead dominates; XLA fuses this.
    if total < min_pallas_elements:
        return _reference(pred, target, alpha)

    # Lane-dense width: multiple of 128 (lanes) and of D, so every row of the
    # (rows, L) view starts at flat index == 0 (mod D) and the pos/rot split
    # depends only on the lane.
    L = (D * 128) // math.gcd(D, 128)
    if L > 32768:
        # TODO(synk): pathological feature widths (huge prime-ish D) would need
        # per-tile modular weights; pose losses have D ~ 7, so fall back.
        return _reference(pred, target, alpha)

    cfg = _tpu_config()
    if n_splits is None:
        n_splits = cfg.n_splits

    rows = -(-total // L)
    aligned = (rows * L == total)

    def _view(x):
        if aligned:
            return x.reshape(rows, L)        # free reshape: zero extra HBM traffic
        # TODO(synk): when N*D is not a multiple of L = lcm(D, 128), no lane-dense
        # 2-D view exists as a free reshape of the contiguous buffer, so one
        # packing copy (pad only to the next L multiple) is unavoidable here
        # without dropping to rank-1 blocks; 128-aligned batches take the
        # zero-copy branch above.
        flat = x.reshape(-1)
        return jnp.pad(flat, (0, rows * L - total)).reshape(rows, L)

    pred2 = _view(pred)
    target2 = _view(target)

    # Row-tile sizing in actual input bytes (bf16 gets 2x the rows of f32).
    itemsize = max(jnp.dtype(pred.dtype).itemsize, jnp.dtype(target.dtype).itemsize)
    cap = max(8, (cfg.block_bytes // (L * itemsize)) // 8 * 8)
    req = cap if tile_rows is None else max(1, int(tile_rows))
    if req >= rows:
        tr = rows                            # single row-tile: full-dim block is legal
    else:
        tr = max(8, (min(req, cap) // 8) * 8)
        if tr >= rows:
            tr = rows
    total_tiles = -(-rows // tr)
    n_splits = max(1, min(int(n_splits), total_tiles))
    tiles_per_split = -(-total_tiles // n_splits)
    last_tile = total_tiles - 1

    def data_map(s, t):
        # Clamp so trailing dead steps of the last split stay in bounds; the
        # kernel masks their contribution to exactly zero.
        return (jnp.minimum(s * tiles_per_split + t, last_tile), 0)

    data_spec = pl.BlockSpec((tr, L), data_map)
    out_spec = pl.BlockSpec((None, 1, L), lambda s, t: (s, 0, 0))

    if n_splits > 1:
        split_sem = pltpu.CORE_PARALLEL if cfg.is_v7 else pltpu.PARALLEL
    else:
        split_sem = pltpu.ARBITRARY

    kernel = functools.partial(_all_nodes_loss_kernel,
                               tiles_per_split=tiles_per_split,
                               tile_rows=tr, valid_rows=rows)

    partials = pl.pallas_call(
        kernel,
        out_shape=jax.ShapeDtypeStruct((n_splits, 1, L), jnp.float32),
        grid=(n_splits, tiles_per_split),
        in_specs=[data_spec, data_spec],
        out_specs=out_spec,
        compiler_params=pltpu.CompilerParams(
            dimension_semantics=(split_sem, pltpu.ARBITRARY),
            vmem_limit_bytes=cfg.vmem_limit_bytes),
    )(pred2, target2)

    # Fold pos/rot split, both means and alpha into a per-lane weight applied
    # once at the end (saves a streamed input + a VPU multiply per element).
    lane = jnp.arange(L, dtype=jnp.int32) % D
    w = jnp.where(lane < 3, 1.0 / (3.0 * N),
                  float(alpha) / (float(D - 3) * N)).astype(jnp.float32)
    lane_sums = jnp.sum(partials, axis=(0, 1))             # (L,)
    return jnp.sum(lane_sums * w)


if __name__ == "__main__":
    key = jax.random.PRNGKey(0)
    k1, k2, k3, k4, k5, k6 = jax.random.split(key, 6)

    # Small shape implied by the forward: (batch=8, 3 position + 4 rotation dims).
    pred_s = jax.random.normal(k1, (8, 7), dtype=jnp.float32)
    targ_s = jax.random.normal(k2, (8, 7), dtype=jnp.float32)
    loss_s = jax.block_until_ready(
        all_nodes_loss(pred_s, targ_s, alpha=20.0, min_pallas_elements=0))
    ref_s = jax.block_until_ready(_reference(pred_s, targ_s, alpha=20.0))
    assert jnp.allclose(loss_s, ref_s, rtol=1e-5, atol=1e-6), (loss_s, ref_s)

    # 128-aligned batch -> zero-copy view, ragged last row-tile (masked in-kernel),
    # forced 2-way split (also exercises the clamped dead grid step).
    pred_a = jax.random.normal(k3, (2560, 7), dtype=jnp.float32)
    targ_a = jax.random.normal(k4, (2560, 7), dtype=jnp.float32)
    ref_a = jax.block_until_ready(_reference(pred_a, targ_a, alpha=20.0))
    loss_a = jax.block_until_ready(
        all_nodes_loss(pred_a, targ_a, alpha=20.0, min_pallas_elements=0,
                       tile_rows=8, n_splits=2))
    assert jnp.allclose(loss_a, ref_a, rtol=1e-4, atol=1e-4), (loss_a, ref_a)

    # Non-aligned bf16 batch: packed (padded) view, auto-sized and forced tiles.
    pred_l = jax.random.normal(k5, (3000, 7), dtype=jnp.float32).astype(jnp.bfloat16)
    targ_l = jax.random.normal(k6, (3000, 7), dtype=jnp.float32).astype(jnp.bfloat16)
    ref_l = jax.block_until_ready(_reference(pred_l, targ_l, alpha=20.0))
    loss_l = jax.block_until_ready(
        all_nodes_loss(pred_l, targ_l, alpha=20.0, min_pallas_elements=0))
    assert jnp.allclose(loss_l, ref_l, rtol=1e-3, atol=1e-3), (loss_l, ref_l)
    loss_l2 = jax.block_until_ready(
        all_nodes_loss(pred_l, targ_l, alpha=20.0, min_pallas_elements=0, tile_rows=8))
    assert jnp.allclose(loss_l2, ref_l, rtol=1e-3, atol=1e-3), (loss_l2, ref_l)

    print("KERNEL_OK")
</pallas_src>

<mosaic_0001>
module attributes {stable_mosaic.version = 11 : i64} {
  func.func @_all_nodes_loss_kernel(%arg0: i32, %arg1: i32, %arg2: memref<1x896xf32, #tpu.memory_space<vmem>>, %arg3: memref<1x896xf32, #tpu.memory_space<vmem>>, %arg4: memref<1x1x896xf32, #tpu.memory_space<vmem>>) attributes {dimension_semantics = [#tpu.dimension_semantics<arbitrary>, #tpu.dimension_semantics<arbitrary>], iteration_bounds = array<i64: 1, 1>, scalar_prefetch = 0 : i64, scratch_operands = 0 : i64, tpu.core_type = #tpu.core_type<tc>, window_params = [{transform_indices = @transform_0, window_bounds = array<i64: 1, 896>}, {transform_indices = @transform_1, window_bounds = array<i64: 1, 896>}, {transform_indices = @transform_2, window_bounds = array<i64: 1, 1, 896>}]} {
    %c1_i32 = arith.constant 1 : i32
    %0 = arith.muli %arg0, %c1_i32 : i32
    %1 = arith.addi %0, %arg1 : i32
    %c1_i32_0 = arith.constant 1 : i32
    %2 = arith.muli %1, %c1_i32_0 : i32
    %c0_i32 = arith.constant 0 : i32
    %3 = arith.cmpi eq, %arg1, %c0_i32 : i32
    %4 = arith.extui %3 : i1 to i32
    %c0_i32_1 = arith.constant 0 : i32
    %5 = arith.cmpi ne, %4, %c0_i32_1 : i32
    scf.if %5 {
      %cst = arith.constant 0.000000e+00 : f32
      %18 = vector.broadcast %cst : f32 to vector<1x896xf32>
      %c0_11 = arith.constant 0 : index
      %c0_12 = arith.constant 0 : index
      %c0_13 = arith.constant 0 : index
      %19 = vector.load %arg4[%c0_11, %c0_12, %c0_13] : memref<1x1x896xf32, #tpu.memory_space<vmem>>, vector<1x1x896xf32>
      %20 = vector.shape_cast %19 : vector<1x1x896xf32> to vector<1x896xf32>
      %21 = vector.shape_cast %18 : vector<1x896xf32> to vector<1x1x896xf32>
      tpu.vector_store %arg4[%c0_11, %c0_12, %c0_13], %21 {strides = array<i32>} : memref<1x1x896xf32, #tpu.memory_space<vmem>>, vector<1x1x896xf32>,
    } else {
    }
    %c0 = arith.constant 0 : index
    %c0_2 = arith.constant 0 : index
    %6 = vector.load %arg2[%c0, %c0_2] : memref<1x896xf32, #tpu.memory_space<vmem>>, vector<1x896xf32>
    %c0_3 = arith.constant 0 : index
    %c0_4 = arith.constant 0 : index
    %7 = vector.load %arg3[%c0_3, %c0_4] : memref<1x896xf32, #tpu.memory_space<vmem>>, vector<1x896xf32>
    %8 = arith.subf %6, %7 : vector<1x896xf32>
    %9 = arith.mulf %8, %8 : vector<1x896xf32>
    %c1_i32_5 = arith.constant 1 : i32
    %10 = arith.addi %2, %c1_i32_5 : i32
    %c1_i32_6 = arith.constant 1 : i32
    %11 = arith.cmpi sle, %10, %c1_i32_6 : i32
    %12 = arith.extui %11 : i1 to i32
    %c0_i32_7 = arith.constant 0 : i32
    %13 = arith.cmpi ne, %12, %c0_i32_7 : i32
    scf.if %13 {
      %c0_11 = arith.constant 0 : index
      %c0_12 = arith.constant 0 : index
      %c0_13 = arith.constant 0 : index
      %18 = vector.load %arg4[%c0_11, %c0_12, %c0_13] : memref<1x1x896xf32, #tpu.memory_space<vmem>>, vector<1x1x896xf32>
      %19 = vector.shape_cast %18 : vector<1x1x896xf32> to vector<1x896xf32>
      %cst = arith.constant dense<0.000000e+00> : vector<896xf32>
      %20 = vector.multi_reduction <add>, %9, %cst [0] : vector<1x896xf32> to vector<896xf32>
      %21 = vector.shape_cast %20 : vector<896xf32> to vector<1x896xf32>
      %22 = arith.addf %19, %21 : vector<1x896xf32>
      %c0_14 = arith.constant 0 : index
      %c0_15 = arith.constant 0 : index
      %c0_16 = arith.constant 0 : index
      %23 = vector.load %arg4[%c0_14, %c0_15, %c0_16] : memref<1x1x896xf32, #tpu.memory_space<vmem>>, vector<1x1x896xf32>
      %24 = vector.shape_cast %23 : vector<1x1x896xf32> to vector<1x896xf32>
      %25 = vector.shape_cast %22 : vector<1x896xf32> to vector<1x1x896xf32>
      tpu.vector_store %arg4[%c0_14, %c0_15, %c0_16], %25 {strides = array<i32>} : memref<1x1x896xf32, #tpu.memory_space<vmem>>, vector<1x1x896xf32>,
    } else {
    }
    %c1_i32_8 = arith.constant 1 : i32
    %14 = arith.addi %2, %c1_i32_8 : i32
    %c1_i32_9 = arith.constant 1 : i32
    %15 = arith.cmpi sgt, %14, %c1_i32_9 : i32
    %16 = arith.extui %15 : i1 to i32
    %c0_i32_10 = arith.constant 0 : i32
    %17 = arith.cmpi ne, %16, %c0_i32_10 : i32
    scf.if %17 {
      %18 = tpu.iota {dimensions = array<i32: 0>} : vector<1x896xi32>
      %19 = vector.broadcast %2 : i32 to vector<1x896xi32>
      %20 = arith.addi %19, %18 : vector<1x896xi32>
      %c0_11 = arith.constant 0 : index
      %c0_12 = arith.constant 0 : index
      %c0_13 = arith.constant 0 : index
      %21 = vector.load %arg4[%c0_11, %c0_12, %c0_13] : memref<1x1x896xf32, #tpu.memory_space<vmem>>, vector<1x1x896xf32>
      %22 = vector.shape_cast %21 : vector<1x1x896xf32> to vector<1x896xf32>
      %c1_i32_14 = arith.constant 1 : i32
      %23 = vector.broadcast %c1_i32_14 : i32 to vector<1x896xi32>
      %24 = arith.cmpi slt, %20, %23 : vector<1x896xi32>
      %cst = arith.constant 0.000000e+00 : f32
      %25 = vector.broadcast %cst : f32 to vector<1x896xf32>
      %26 = arith.select %24, %9, %25 : vector<1x896xi1>, vector<1x896xf32>
      %cst_15 = arith.constant dense<0.000000e+00> : vector<896xf32>
      %27 = vector.multi_reduction <add>, %26, %cst_15 [0] : vector<1x896xf32> to vector<896xf32>
      %28 = vector.shape_cast %27 : vector<896xf32> to vector<1x896xf32>
      %29 = arith.addf %22, %28 : vector<1x896xf32>
      %c0_16 = arith.constant 0 : index
      %c0_17 = arith.constant 0 : index
      %c0_18 = arith.constant 0 : index
      %30 = vector.load %arg4[%c0_16, %c0_17, %c0_18] : memref<1x1x896xf32, #tpu.memory_space<vmem>>, vector<1x1x896xf32>
      %31 = vector.shape_cast %30 : vector<1x1x896xf32> to vector<1x896xf32>
      %32 = vector.shape_cast %29 : vector<1x896xf32> to vector<1x1x896xf32>
      tpu.vector_store %arg4[%c0_16, %c0_17, %c0_18], %32 {strides = array<i32>} : memref<1x1x896xf32, #tpu.memory_space<vmem>>, vector<1x1x896xf32>,
    } else {
    }
    return
  }
  func.func @transform_0(%arg0: i32, %arg1: i32) -> (i32, i32) {
    %c1_i32 = arith.constant 1 : i32
    %0 = arith.muli %arg0, %c1_i32 : i32
    %1 = arith.addi %0, %arg1 : i32
    %c0_i32 = arith.constant 0 : i32
    %2 = arith.minsi %1, %c0_i32 : i32
    %c0_i32_0 = arith.constant 0 : i32
    %c0_i32_1 = arith.constant 0 : i32
    return %2, %c0_i32_0 : i32, i32
  }
  func.func @transform_1(%arg0: i32, %arg1: i32) -> (i32, i32) {
    %c1_i32 = arith.constant 1 : i32
    %0 = arith.muli %arg0, %c1_i32 : i32
    %1 = arith.addi %0, %arg1 : i32
    %c0_i32 = arith.constant 0 : i32
    %2 = arith.minsi %1, %c0_i32 : i32
    %c0_i32_0 = arith.constant 0 : i32
    %c0_i32_1 = arith.constant 0 : i32
    return %2, %c0_i32_0 : i32, i32
  }
  func.func @transform_2(%arg0: i32, %arg1: i32) -> (i32, i32, i32) {
    %c0_i32 = arith.constant 0 : i32
    %c0_i32_0 = arith.constant 0 : i32
    %c0_i32_1 = arith.constant 0 : i32
    return %arg0, %c0_i32, %c0_i32_0 : i32, i32, i32
  }
}

</mosaic_0001>

<llo_original>
// kernel: tpu_custom_call.1
$region0: #{tpu_custom_call.1}
  #allocation0 [shape = 'u32[]', space=smem, size = 0x4, offset = 0x4, fixed_abs, tag = 'smem constant byte address 0x4 - core index']
  #allocation1 [shape = 'u32[72,128]{1,0:T(1,128)}', space=vmem, size = 0x9000, scoped, tag = 'internal scratch']
  %s0 = inlined_call_operand.hbm [shape: f32[1,896], index: 0, kind: input, shape index: {}]
  %s1 = inlined_call_operand.hbm [shape: f32[1,896], index: 1, kind: input, shape index: {}]
  %s2 = inlined_call_operand.hbm [shape: f32[1,1,896], index: 2, kind: output, shape index: {}]
  %s3 = sld [smem:[#allocation0]]
  $region38: #{tpu_custom_call.1} parent=0
    _
  %s5 = ssub.s32 1, %s3
  %s6 = scalar_select 0, %s5, %s3
  $region1: #{tpu_custom_call.1} parent=0
    #allocation2 [shape = 'u8[3584]{0}', space=vmem, size = 0x1000, scoped, tag = 'input window, operand 0, single buffered']
    #allocation3 [shape = 's32[1]{0}', space=sflag, size = 0x4, scoped, tag = 'scoped memory for tpu_custom_call.1']
    #allocation4 [shape = 's32[1]{0}', space=sflag, size = 0x4, scoped, tag = 'scoped memory for tpu_custom_call.1']
    #allocation5 [shape = 'u8[3584]{0}', space=vmem, size = 0x1000, scoped, tag = 'input window, operand 1, single buffered']
    #allocation6 [shape = 's32[1]{0}', space=sflag, size = 0x4, scoped, tag = 'scoped memory for tpu_custom_call.1']
    #allocation7 [shape = 'u8[3584]{0}', space=vmem, size = 0x1000, scoped, tag = 'output window, operand 0, single buffered']
    %7 = vsyncpa [#allocation3], 0
    %8 = vsyncpa [#allocation6], 0
    %9 = vsyncpa [#allocation4], 0
    // Predicated region
    $region2: #{tpu_custom_call.1} parent=1 // pred_check
      _
    $region3: #{tpu_custom_call.1} parent=1 // pred_check_branch
      %11 = sbr.rel (0) target = $region5
    $region4: #{tpu_custom_call.1} parent=1 // pred_region
      %s12 = sadd.s32 0, 0
      %p13 = scmp.lt.s32.totalorder %s12, 0
      %s14 = scalar_select %p13, %s12, 0
      %16 = vsyncadd [#allocation3], 0
      %s17 = smul.addr %s14, 7
      %s18 = scalar_lea.hbm %s0, %s17
      %s20 = sshll.u32 %s18, 4
      %s21 = int_to_ptr.hbm [resolvable:$true] %s20
      %s22 = sshll.u32 [#allocation2], 4
      %s23 = int_to_ptr.vmem [resolvable:$true] %s22
      %25 = dma.hbm_to_vmem [thread:$0]  %s21, 112, %s23, [#allocation3]
    $region5: #{tpu_custom_call.1} parent=1 // pred_fallthru
      _
    // Predicated region
    $region6: #{tpu_custom_call.1} parent=1 // pred_check
      _
    $region7: #{tpu_custom_call.1} parent=1 // pred_check_branch
      %27 = sbr.rel (0) target = $region9
    $region8: #{tpu_custom_call.1} parent=1 // pred_region
      %s28 = sadd.s32 0, 0
      %p29 = scmp.lt.s32.totalorder %s28, 0
      %s30 = scalar_select %p29, %s28, 0
      %32 = vsyncadd [#allocation6], 0
      %s33 = smul.addr %s30, 7
      %s34 = scalar_lea.hbm %s1, %s33
      %s36 = sshll.u32 %s34, 4
      %s37 = int_to_ptr.hbm [resolvable:$true] %s36
      %s38 = sshll.u32 [#allocation5], 4
      %s39 = int_to_ptr.vmem [resolvable:$true] %s38
      %41 = dma.hbm_to_vmem [thread:$0]  %s37, 112, %s39, [#allocation6]
    $region9: #{tpu_custom_call.1} parent=1 // pred_fallthru
      _
    // Predicated region
    $region10: #{tpu_custom_call.1} parent=1 // pred_check
      _
    $region11: #{tpu_custom_call.1} parent=1 // pred_check_branch
      %43 = sbr.rel (0) target = $region13
    $region12: #{tpu_custom_call.1} parent=1 // pred_region
      %45 = dma.done [#allocation3], 112
    $region13: #{tpu_custom_call.1} parent=1 // pred_fallthru
      _
    // Predicated region
    $region14: #{tpu_custom_call.1} parent=1 // pred_check
      _
    $region15: #{tpu_custom_call.1} parent=1 // pred_check_branch
      %47 = sbr.rel (0) target = $region17
    $region16: #{tpu_custom_call.1} parent=1 // pred_region
      %49 = dma.done [#allocation6], 112
    $region17: #{tpu_custom_call.1} parent=1 // pred_fallthru
      _
    %s50 = sadd.s32 0, 0
    %p51 = scmp.lt.s32.totalorder %s50, 0
    %s52 = scalar_select %p51, %s50, 0
    %s53 = sadd.s32 0, 0
    %p54 = scmp.lt.s32.totalorder %s53, 0
    %s55 = scalar_select %p54, %s53, 0
    %s56 = sadd.s32 0, 0
    %p57 = scmp.eq.s32.totalorder 0, 0
    // Predicated region
    $region18: #{tpu_custom_call.1} parent=1 // pred_check
      %p58 = pneg %p57
    $region19: #{tpu_custom_call.1} parent=1 // pred_check_branch
      %60 = sbr.rel (%p58) target = $region21
    $region20: #{tpu_custom_call.1} parent=1 // pred_region
      %v61 = vlaneseq
      %vm62 = vcmp.ge.s32.totalorder %v61, 0
      %vm63 = vcmp.lt.s32.totalorder %v61, 896
      %vm64 = vmand %vm62, %vm63
      %65 = vst.msk [vmem:[#allocation7] sm:$0x7f] %vm64, 0.0
    $region21: #{tpu_custom_call.1} parent=1 // pred_fallthru
      _
    %v66 = vld [vmem:[#allocation2] sm:$0xff]
    %v67 = vld [vmem:[#allocation5] sm:$0xff]
    %v68 = vsub.f32 %v66, %v67
    %v69 = vmul.f32 %v68, %v68
    %s70 = sadd.s32 %s56, 1
    %p71 = scmp.le.s32.totalorder %s70, 1
    // Predicated region
    $region22: #{tpu_custom_call.1} parent=1 // pred_check
      %p72 = pneg %p71
    $region23: #{tpu_custom_call.1} parent=1 // pred_check_branch
      %74 = sbr.rel (%p72) target = $region25
    $region24: #{tpu_custom_call.1} parent=1 // pred_region
      %v75 = vld [vmem:[#allocation7] sm:$0xff]
      %v76 = vadd.f32 %v69, 0.0
      %v77 = vadd.f32 %v75, %v76
      %v78 = vlaneseq
      %vm79 = vcmp.ge.s32.totalorder %v78, 0
      %vm80 = vcmp.lt.s32.totalorder %v78, 896
      %vm81 = vmand %vm79, %vm80
      %82 = vst.msk [vmem:[#allocation7] sm:$0x7f] %vm81, %v77
    $region25: #{tpu_custom_call.1} parent=1 // pred_fallthru
      _
    %p83 = scmp.gt.s32.totalorder %s70, 1
    // Predicated region
    $region26: #{tpu_custom_call.1} parent=1 // pred_check
      %p84 = pneg %p83
    $region27: #{tpu_custom_call.1} parent=1 // pred_check_branch
      %86 = sbr.rel (%p84) target = $region29
    $region28: #{tpu_custom_call.1} parent=1 // pred_region
      %v87 = vlaneseq
      %v88 = vshrl.u32 %v87, 7
      %v89 = vstv %s56
      %v90 = vadd.s32 %v89, %v88
      %v91 = vld [vmem:[#allocation7] sm:$0xff]
      %vm92 = vcmp.lt.s32.totalorder %v90, 1
      %v94 = vperm.slane %v69, 0
      %v95 = vperm.slane %v69, 1
      %v96 = vperm.slane %v69, 2
      %v97 = vperm.slane %v69, 3
      %v98 = vperm.slane %v69, 4
      %v99 = vperm.slane %v69, 5
      %v100 = vperm.slane %v69, 6
      %v108 = vsel %vm92, %v94, 0.0
      %v109 = vsel %vm92, %v95, 0.0
      %v110 = vsel %vm92, %v96, 0.0
      %v111 = vsel %vm92, %v97, 0.0
      %v112 = vsel %vm92, %v98, 0.0
      %v113 = vsel %vm92, %v99, 0.0
      %v114 = vsel %vm92, %v100, 0.0
      %v115 = vadd.f32 %v108, 0.0
      %v116 = vadd.f32 %v109, 0.0
      %v117 = vadd.f32 %v110, 0.0
      %v118 = vadd.f32 %v111, 0.0
      %v119 = vadd.f32 %v112, 0.0
      %v120 = vadd.f32 %v113, 0.0
      %v121 = vadd.f32 %v114, 0.0
      %v129 = vrot.slane %v116, 7
      %v130 = vrot.slane %v117, 6
      %v131 = vrot.slane %v118, 5
      %v132 = vrot.slane %v119, 4
      %v133 = vrot.slane %v120, 3
      %v134 = vrot.slane %v121, 2
      %vm135 = vcmask 1040384
      %v136 = vsel %vm135, %v115, %v129
      %vm137 = vcmask 1042434
      %v138 = vsel %vm137, %v130, %v131
      %vm139 = vcmask 1041408
      %v140 = vsel %vm139, %v136, %v138
      %vm141 = vcmask 1044484
      %v142 = vsel %vm141, %v132, %v133
      %vm143 = vcmask 1045508
      %v144 = vsel %vm143, %v142, %v134
      %vm145 = vcmask 1043456
      %v146 = vsel %vm145, %v140, %v144
      %v148 = vadd.f32 %v91, %v146
      %v149 = vlaneseq
      %vm150 = vcmp.ge.s32.totalorder %v149, 0
      %vm151 = vcmp.lt.s32.totalorder %v149, 896
      %vm152 = vmand %vm150, %vm151
      %153 = vst.msk [vmem:[#allocation7] sm:$0x7f] %vm152, %v148
    $region29: #{tpu_custom_call.1} parent=1 // pred_fallthru
      _
    // Predicated region
    $region30: #{tpu_custom_call.1} parent=1 // pred_check
      _
    $region31: #{tpu_custom_call.1} parent=1 // pred_check_branch
      %155 = sbr.rel (0) target = $region33
    $region32: #{tpu_custom_call.1} parent=1 // pred_region
      %157 = vsyncadd [#allocation4], 0
      %s159 = sshll.u32 [#allocation7], 4
      %s160 = int_to_ptr.vmem [resolvable:$true] %s159
      %s161 = sshll.u32 %s2, 4
      %s162 = int_to_ptr.hbm [resolvable:$true] %s161
      %164 = dma.vmem_to_hbm [thread:$0]  %s160, 112, %s162, [#allocation4]
    $region33: #{tpu_custom_call.1} parent=1 // pred_fallthru
      _
    // Predicated region
    $region34: #{tpu_custom_call.1} parent=1 // pred_check
      _
    $region35: #{tpu_custom_call.1} parent=1 // pred_check_branch
      %166 = sbr.rel (0) target = $region37
    $region36: #{tpu_custom_call.1} parent=1 // pred_region
      %168 = dma.done [#allocation4], 112
    $region37: #{tpu_custom_call.1} parent=1 // pred_fallthru
      _
    %169 = vsyncpa [#allocation3], 1
    %170 = vsyncpa [#allocation6], 1
    %171 = vsyncpa [#allocation4], 1

</llo_original>
